<compile_context>
chip_gen: v6e
topology: v6e:2x2x1
jax: 0.10.0
libtpu: 0.0.40
codegen_flags: <defaults>
</compile_context>

<pallas_src>
import functools

import jax
import jax.numpy as jnp
import numpy as np
from jax import lax
from jax.experimental import pallas as pl
from jax.experimental.pallas import tpu as pltpu

NUM_CLASS = 4
SCALE_FACTOR = 2.0
STRIDE = 4
ALPHA = 2        # Smooth_Heatmap_Loss.alpha
BETA = 4         # Smooth_Heatmap_Loss.beta
DELTA = 0.01     # Smooth_Heatmap_Loss.delta
EPS = 1e-9       # guards 0/0 in GIoU for degenerate / masked boxes


def _round_up(x, m):
    return ((x + m - 1) // m) * m


def _smooth_l1(x, t, beta):
    n = jnp.abs(x - t)
    return jnp.where(n < beta, (0.5 / beta) * n * n, n - 0.5 * beta)


def _sigmoid(x):  # used by the pure-JAX reference only
    return 1.0 / (1.0 + jnp.exp(-x))


def _sum_rows(x):
    """(k, T) -> (1, T) via explicit row adds (tiny k, pure VPU)."""
    acc = x[0:1]
    for i in range(1, x.shape[0]):
        acc = acc + x[i:i + 1]
    return acc


def _fold_lanes(row, tile_n):
    """(1, T) -> (1, 128) partial sum using vreg-aligned 128-lane chunks."""
    acc = row[:, 0:128]
    for j in range(1, tile_n // 128):
        acc = acc + row[:, j * 128:(j + 1) * 128]
    return acc


def _giou_cf(b1, b2, recip):
    """GIoU for channels-first boxes b1, b2: [4, T] rows = (cx, cy, w, h)."""
    b1_c1 = b1[0:2] - b1[2:4] * 0.5
    b1_c2 = b1[0:2] + b1[2:4] * 0.5
    b2_c1 = b2[0:2] - b2[2:4] * 0.5
    b2_c2 = b2[0:2] + b2[2:4] * 0.5
    b1_lu = jnp.minimum(b1_c1, b1_c2)
    b1_rd = jnp.maximum(b1_c1, b1_c2)
    b2_lu = jnp.minimum(b2_c1, b2_c2)
    b2_rd = jnp.maximum(b2_c1, b2_c2)

    b1_wh = b1_rd - b1_lu
    b2_wh = b2_rd - b2_lu
    a1 = b1_wh[0:1] * b1_wh[1:2]
    a2 = b2_wh[0:1] * b2_wh[1:2]

    inter_lu = jnp.maximum(b1_lu, b2_lu)
    inter_rd = jnp.minimum(b1_rd, b2_rd)
    inter_wh = jnp.maximum(inter_rd - inter_lu, 0.0)
    inter = inter_wh[0:1] * inter_wh[1:2]
    union = a1 + a2 - inter

    enc_lu = jnp.minimum(b1_lu, b2_lu)
    enc_rd = jnp.maximum(b1_rd, b2_rd)
    enc_wh = jnp.maximum(enc_rd - enc_lu, 0.0)
    enc = enc_wh[0:1] * enc_wh[1:2]

    inv_union = recip(jnp.maximum(union, EPS))
    inv_enc = recip(jnp.maximum(enc, EPS))
    iou = inter * inv_union
    return iou - (enc - union) * inv_enc          # [1, T]


# ---------------------------------------------------------------------------
# Pallas kernel
# ---------------------------------------------------------------------------
def _loss_kernel(p_ref, pd_ref, lab_ref, out_ref, *, img_size, n_valid, tile_n,
                 tiles_per_split, total_tiles, num_class, has_tail, exact_cover):
    s = pl.program_id(0)            # parallel split (v7x megacore)
    t = pl.program_id(1)            # reduction tile index ("arbitrary")
    g = s * tiles_per_split + t     # global tile index

    @pl.when(t == 0)
    def _init():
        out_ref[...] = jnp.zeros_like(out_ref)

    if has_tail:
        # Only the final partial tile rewrites its out-of-range lanes with values
        # that make every loss term exactly zero there (mask rows -> 0, logits -> -30
        # so sigmoid ~ 0 and the heatmap "other" term vanishes).  Statically removed
        # when N is a multiple of tile_n.
        @pl.when(g == total_tiles - 1)
        def _sanitize_tail():
            lane = lax.broadcasted_iota(jnp.int32, (1, tile_n), 1)
            keep = lane < (n_valid - g * tile_n)
            p_ref[...] = jnp.where(keep, p_ref[...], -30.0)
            pd_ref[...] = jnp.where(keep, pd_ref[...], 0.0)
            lab_ref[...] = jnp.where(keep, lab_ref[...], 0.0)

    def _body():
        f32 = jnp.float32
        recip = lambda v: pl.reciprocal(v, approx=True)

        # channels-first rows; dead channels (p rows 4..8, label row 15) never read
        p_txty = p_ref[0:2, :].astype(f32)
        p_twth = p_ref[2:4, :].astype(f32)
        p_cls = p_ref[9:, :].astype(f32)

        pd_xywh = pd_ref[0:4, :].astype(f32)
        pd_a = pd_ref[4:8, :].astype(f32)
        pd_r = pd_ref[8:9, :].astype(f32)

        lab_xywh = lab_ref[0:4, :].astype(f32)
        lab_txty = lab_ref[4:6, :].astype(f32)
        lab_twth = lab_ref[6:8, :].astype(f32)
        lab_a = lab_ref[8:12, :].astype(f32)
        lab_r = lab_ref[12:13, :].astype(f32)
        lab_mask = lab_ref[13:14, :].astype(f32)
        lab_mix = lab_ref[14:15, :].astype(f32)
        lab_cls = lab_ref[16:, :].astype(f32)

        mm = lab_mask * lab_mix                                        # [1, T]

        # ---- IoU loss (GIoU) ----
        giou = _giou_cf(pd_xywh, lab_xywh, recip)
        inv_area = 1.0 / float(img_size * img_size)
        bbox_scale = (SCALE_FACTOR
                      - (SCALE_FACTOR - 1.0) * lab_xywh[2:3] * lab_xywh[3:4] * inv_area)
        r_iou = bbox_scale * (1.0 - giou) * mm

        # ---- txty: BCEWithLogits(sigmoid(p)*1.05 - 0.025, label_txty) ----
        e1 = jnp.exp(-jnp.abs(p_txty))
        sig = jnp.where(p_txty >= 0.0, 1.0, e1) / (1.0 + e1)
        x = sig * 1.05 - (1.05 - 1.0) / 2.0
        e2 = jnp.exp(-jnp.abs(x))
        bce = jnp.maximum(x, 0.0) - x * lab_txty + jnp.log(1.0 + e2)
        r_txty = _sum_rows(bce) * mm

        # ---- twth: SmoothL1 (beta = 1.0, torch default) ----
        r_twth = _sum_rows(_smooth_l1(p_twth, lab_twth, 1.0)) * (bbox_scale * mm)

        # ---- a / r: SmoothL1 (beta = 1/9) ----
        r_a = _sum_rows(_smooth_l1(pd_a, lab_a, 1.0 / 9.0)) * mm
        r_r = _smooth_l1(pd_r, lab_r, 1.0 / 9.0) * mm

        # ---- Smooth heatmap class loss (one exp + one log per element) ----
        z = p_cls
        ez = jnp.exp(-jnp.abs(z))
        log1p_ez = jnp.log(1.0 + ez)
        inputs = jnp.where(z >= 0.0, 1.0, ez) / (1.0 + ez)
        log_sig = jnp.minimum(z, 0.0) - log1p_ez        # log(sigmoid(z))
        log_om_sig = -jnp.maximum(z, 0.0) - log1p_ez    # log(1 - sigmoid(z))
        center_id = (lab_cls == 1.0).astype(f32)
        t_sm = lab_cls * (1.0 - DELTA) + DELTA / num_class
        om_in = 1.0 - inputs
        q = 1.0 - t_sm
        q2 = q * q
        cls_map = (-center_id * t_sm * (om_in * om_in) * log_sig * 5.0
                   - (1.0 - center_id) * (q2 * q2) * (inputs * inputs) * log_om_sig)
        r_cls = _sum_rows(cls_map)

        # ---- per-lane partial sums into the resident (8, 128) output block ----
        rows = (r_iou, r_cls, r_a, r_r, r_txty, r_twth)
        upd = jnp.concatenate([_fold_lanes(r, tile_n) for r in rows]
                              + [jnp.zeros((2, 128), f32)], axis=0)
        out_ref[...] += upd

    if exact_cover:
        _body()
    else:
        pl.when(g < total_tiles)(_body)   # skip the clamped duplicate tile (if any)


# ---------------------------------------------------------------------------
# wrapper
# ---------------------------------------------------------------------------
@functools.partial(jax.jit, static_argnames=("tile_n",))
def gghl_centernet_loss(p, p_d, label, *, tile_n=32768):
    """Pallas implementation of Loss.forward(p, p_d, label_bbox)."""
    B, H, W = p.shape[:3]
    img_size = STRIDE * H
    N = B * H * W
    Cp, Cd, Cl = p.shape[-1], p_d.shape[-1], label.shape[-1]
    num_class = Cp - 9
    if N < 128:
        raise ValueError("B*H*W must be >= 128 (CenterNet stride-4 maps always are)")

    # Channels-first relayout: exactly ONE copy per input (a bare transpose).
    # No concat / channel-prune / pad passes (perf item 1a); ragged N handled in-kernel.
    p_t = jnp.swapaxes(p.reshape(N, Cp), 0, 1)        # [Cp, N]
    pd_t = jnp.swapaxes(p_d.reshape(N, Cd), 0, 1)     # [Cd, N]
    lab_t = jnp.swapaxes(label.reshape(N, Cl), 0, 1)  # [Cl, N]

    # tile sizing: lane axis must be a multiple of 128 and <= N
    tile_n = max(128, min(tile_n, (N // 128) * 128))
    tile_n -= tile_n % 128
    total_tiles = pl.cdiv(N, tile_n)
    num_splits = 2 if total_tiles >= 8 else 1          # megacore split only when useful
    tiles_per_split = pl.cdiv(total_tiles, num_splits)
    has_tail = (N % tile_n) != 0
    exact_cover = (num_splits * tiles_per_split == total_tiles)

    # double-buffered, sublane-compact channels-first windows
    win_bytes = 2 * 4 * tile_n * (_round_up(Cp, 8) + _round_up(Cd, 8) + _round_up(Cl, 8))
    vmem_limit = int(min(56 * 2**20, win_bytes + 24 * 2**20))   # cap for v7x (64 MiB phys)

    kernel = functools.partial(
        _loss_kernel, img_size=img_size, n_valid=N, tile_n=tile_n,
        tiles_per_split=tiles_per_split, total_tiles=total_tiles,
        num_class=num_class, has_tail=has_tail, exact_cover=exact_cover)

    idx = lambda s, t: (0, jnp.minimum(s * tiles_per_split + t, total_tiles - 1))

    out = pl.pallas_call(
        kernel,
        out_shape=jax.ShapeDtypeStruct((num_splits * 8, 128), jnp.float32),
        grid=(num_splits, tiles_per_split),
        in_specs=[pl.BlockSpec((Cp, tile_n), idx),
                  pl.BlockSpec((Cd, tile_n), idx),
                  pl.BlockSpec((Cl, tile_n), idx)],
        out_specs=pl.BlockSpec((8, 128), lambda s, t: (s, 0)),
        compiler_params=pltpu.CompilerParams(
            dimension_semantics=("parallel", "arbitrary"),
            vmem_limit_bytes=vmem_limit),
    )(p_t, pd_t, lab_t)

    # final 128 -> 1 reduction (and per-core combine) once, in the wrapper
    sums = jnp.sum(out.reshape(num_splits, 8, 128), axis=(0, 2))
    bs = jnp.float32(B)
    loss_iou = sums[0] / bs
    loss_cls = sums[1] / bs
    loss_a = sums[2] / bs
    loss_r = 16.0 * sums[3] / bs
    loss_txty = sums[4] / bs
    loss_twth = sums[5] / bs
    loss = loss_iou + (loss_a + loss_r) + loss_cls + loss_txty + loss_twth
    return loss, loss_iou, loss_cls, loss_a, loss_r, loss_txty, loss_twth


# ---------------------------------------------------------------------------
# Pure-JAX reference (independent, channels-last, exact divides)
# ---------------------------------------------------------------------------
def _giou_xywh_ref(b1, b2):
    b1c = jnp.concatenate([b1[..., :2] - b1[..., 2:] * 0.5,
                           b1[..., :2] + b1[..., 2:] * 0.5], axis=-1)
    b2c = jnp.concatenate([b2[..., :2] - b2[..., 2:] * 0.5,
                           b2[..., :2] + b2[..., 2:] * 0.5], axis=-1)
    b1c = jnp.concatenate([jnp.minimum(b1c[..., :2], b1c[..., 2:]),
                           jnp.maximum(b1c[..., :2], b1c[..., 2:])], axis=-1)
    b2c = jnp.concatenate([jnp.minimum(b2c[..., :2], b2c[..., 2:]),
                           jnp.maximum(b2c[..., :2], b2c[..., 2:])], axis=-1)
    a1 = (b1c[..., 2] - b1c[..., 0]) * (b1c[..., 3] - b1c[..., 1])
    a2 = (b2c[..., 2] - b2c[..., 0]) * (b2c[..., 3] - b2c[..., 1])
    inter_lu = jnp.maximum(b1c[..., :2], b2c[..., :2])
    inter_rd = jnp.minimum(b1c[..., 2:], b2c[..., 2:])
    inter_wh = jnp.maximum(inter_rd - inter_lu, 0.0)
    inter = inter_wh[..., 0] * inter_wh[..., 1]
    union = a1 + a2 - inter
    iou = inter / jnp.maximum(union, EPS)
    enc_lu = jnp.minimum(b1c[..., :2], b2c[..., :2])
    enc_rd = jnp.maximum(b1c[..., 2:], b2c[..., 2:])
    enc_wh = jnp.maximum(enc_rd - enc_lu, 0.0)
    enc = enc_wh[..., 0] * enc_wh[..., 1]
    giou = iou - (enc - union) / jnp.maximum(enc, EPS)
    return giou[..., None]


def reference_loss(p, p_d, label):
    B, H, W = p.shape[:3]
    img_size = STRIDE * H
    N = B * H * W
    p2 = p.reshape(N, -1).astype(jnp.float32)
    pd2 = p_d.reshape(N, -1).astype(jnp.float32)
    lab2 = label.reshape(N, -1).astype(jnp.float32)

    p_d_xywh = pd2[:, 0:4]
    p_d_a = pd2[:, 4:8]
    p_d_r = pd2[:, 8:9]
    p_cls = p2[:, 9:]
    label_xywh = lab2[:, 0:4]
    label_txtytwth = lab2[:, 4:8]
    label_a = lab2[:, 8:12]
    label_r = lab2[:, 12:13]
    label_mask = lab2[:, 13:14]
    label_mix = lab2[:, 14:15]
    label_cls = lab2[:, 16:]

    giou = _giou_xywh_ref(p_d_xywh, label_xywh)
    bbox_scale = SCALE_FACTOR - (SCALE_FACTOR - 1.0) * \
        label_xywh[:, 2:3] * label_xywh[:, 3:4] / float(img_size * img_size)
    loss_iou_map = bbox_scale * (1.0 - giou) * label_mix * label_mask

    x = _sigmoid(p2[:, 0:2]) * 1.05 - (1.05 - 1.0) / 2.0
    y = label_txtytwth[:, 0:2]
    bce = jnp.maximum(x, 0.0) - x * y + jnp.log(1.0 + jnp.exp(-jnp.abs(x)))
    loss_txty_map = jnp.sum(bce, axis=-1, keepdims=True) * label_mask * label_mix

    sl1 = _smooth_l1(p2[:, 2:4], label_txtytwth[:, 2:4], 1.0)
    loss_twth_map = jnp.sum(sl1, axis=-1, keepdims=True) * bbox_scale * label_mix * label_mask

    loss_a_map = _smooth_l1(p_d_a, label_a, 1.0 / 9.0) * label_mix * label_mask
    loss_r_map = _smooth_l1(p_d_r, label_r, 1.0 / 9.0) * label_mix * label_mask

    inputs = _sigmoid(p_cls)
    center_id = (label_cls == 1.0).astype(jnp.float32)
    other_id = (label_cls != 1.0).astype(jnp.float32)
    t_smooth = label_cls * (1.0 - DELTA) + DELTA * 1.0 / NUM_CLASS
    center_loss = -center_id * t_smooth * (1.0 - inputs) ** ALPHA * \
        jnp.log(inputs + 1e-14) * 5.0
    other_loss = -other_id * (1.0 - t_smooth) ** BETA * inputs ** ALPHA * \
        jnp.log(1.0 - inputs + 1e-14)
    loss_cls_map = center_loss + other_loss

    bs = float(B)
    loss_iou = jnp.sum(loss_iou_map) / bs
    loss_cls = jnp.sum(loss_cls_map) / bs
    loss_a = jnp.sum(loss_a_map) / bs
    loss_r = 16.0 * jnp.sum(loss_r_map) / bs
    loss_txty = jnp.sum(loss_txty_map) / bs
    loss_twth = jnp.sum(loss_twth_map) / bs
    loss = loss_iou + (loss_a + loss_r) + loss_cls + loss_txty + loss_twth
    return loss, loss_iou, loss_cls, loss_a, loss_r, loss_txty, loss_twth


# ---------------------------------------------------------------------------
if __name__ == "__main__":
    B, H, W = 2, 16, 16
    img_size = STRIDE * H

    key = jax.random.PRNGKey(0)
    keys = jax.random.split(key, 12)

    # raw head output p: [B,H,W, 9 + NUM_CLASS]
    p = jax.random.normal(keys[0], (B, H, W, 9 + NUM_CLASS), jnp.float32)

    # decoded predictions p_d: xywh (positive w/h), a(4), r(1)
    pd_xy = jax.random.uniform(keys[1], (B, H, W, 2), minval=0.0, maxval=img_size)
    pd_wh = jax.random.uniform(keys[2], (B, H, W, 2), minval=4.0, maxval=32.0)
    pd_a = jax.random.uniform(keys[3], (B, H, W, 4), minval=0.0, maxval=1.0)
    pd_r = jax.random.uniform(keys[4], (B, H, W, 1), minval=0.0, maxval=1.0)
    p_d = jnp.concatenate([pd_xy, pd_wh, pd_a, pd_r], axis=-1)

    # label: xywh(4) txtytwth(4) a(4) r(1) mask(1) mix(1) unused(1) cls(NUM_CLASS)
    lb_xy = jax.random.uniform(keys[5], (B, H, W, 2), minval=0.0, maxval=img_size)
    lb_wh = jax.random.uniform(keys[6], (B, H, W, 2), minval=4.0, maxval=32.0)
    lb_txty = jax.random.uniform(keys[7], (B, H, W, 2), minval=0.0, maxval=1.0)
    lb_twth = jax.random.normal(keys[8], (B, H, W, 2), jnp.float32)
    lb_a = jax.random.uniform(keys[9], (B, H, W, 4), minval=0.0, maxval=1.0)
    lb_r = jax.random.uniform(keys[10], (B, H, W, 1), minval=0.0, maxval=1.0)
    mask = (jax.random.uniform(keys[11], (B, H, W, 1)) > 0.5).astype(jnp.float32)
    mix = jnp.full((B, H, W, 1), 0.7, jnp.float32)
    unused = jnp.zeros((B, H, W, 1), jnp.float32)
    cls_u = jax.random.uniform(jax.random.fold_in(key, 99), (B, H, W, NUM_CLASS))
    lb_cls = jnp.where(cls_u > 0.97, 1.0, cls_u)   # some exact 1.0 centers
    label = jnp.concatenate(
        [lb_xy, lb_wh, lb_txty, lb_twth, lb_a, lb_r, mask, mix, unused, lb_cls],
        axis=-1)

    out = gghl_centernet_loss(p, p_d, label)
    out = jax.block_until_ready(out)

    ref = reference_loss(p, p_d, label)
    # approx reciprocal inside the in-kernel GIoU -> slightly looser tolerance
    np.testing.assert_allclose(np.array(out), np.array(ref), rtol=5e-3, atol=5e-3)
    assert np.all(np.isfinite(np.array(out)))

    print("KERNEL_OK")
</pallas_src>

<mosaic_0001>
module attributes {stable_mosaic.version = 11 : i64} {
  func.func @_loss_kernel(%arg0: i32, %arg1: i32, %arg2: memref<13x512xf32, #tpu.memory_space<vmem>>, %arg3: memref<9x512xf32, #tpu.memory_space<vmem>>, %arg4: memref<20x512xf32, #tpu.memory_space<vmem>>, %arg5: memref<8x128xf32, #tpu.memory_space<vmem>>) attributes {dimension_semantics = [#tpu.dimension_semantics<parallel>, #tpu.dimension_semantics<arbitrary>], iteration_bounds = array<i64: 1, 1>, scalar_prefetch = 0 : i64, scratch_operands = 0 : i64, tpu.core_type = #tpu.core_type<tc>, window_params = [{transform_indices = @transform_0, window_bounds = array<i64: 13, 512>}, {transform_indices = @transform_1, window_bounds = array<i64: 9, 512>}, {transform_indices = @transform_2, window_bounds = array<i64: 20, 512>}, {transform_indices = @transform_3, window_bounds = array<i64: 8, 128>}]} {
    %c0_i32 = arith.constant 0 : i32
    %0 = arith.cmpi eq, %arg1, %c0_i32 : i32
    %1 = arith.extui %0 : i1 to i32
    %c0_i32_0 = arith.constant 0 : i32
    %2 = arith.cmpi ne, %1, %c0_i32_0 : i32
    scf.if %2 {
      %cst_69 = arith.constant 0.000000e+00 : f32
      %271 = vector.broadcast %cst_69 : f32 to vector<8x128xf32>
      %c0_70 = arith.constant 0 : index
      %c0_71 = arith.constant 0 : index
      %272 = vector.load %arg5[%c0_70, %c0_71] : memref<8x128xf32, #tpu.memory_space<vmem>>, vector<8x128xf32>
      tpu.vector_store %arg5[%c0_70, %c0_71], %271 {strides = array<i32>} : memref<8x128xf32, #tpu.memory_space<vmem>>, vector<8x128xf32>,
    } else {
    }
    %c0 = arith.constant 0 : index
    %c0_1 = arith.constant 0 : index
    %3 = vector.load %arg2[%c0, %c0_1] : memref<13x512xf32, #tpu.memory_space<vmem>>, vector<2x512xf32>
    %c2 = arith.constant 2 : index
    %c0_2 = arith.constant 0 : index
    %4 = vector.load %arg2[%c2, %c0_2] : memref<13x512xf32, #tpu.memory_space<vmem>>, vector<2x512xf32>
    %c9 = arith.constant 9 : index
    %c0_3 = arith.constant 0 : index
    %5 = vector.load %arg2[%c9, %c0_3] : memref<13x512xf32, #tpu.memory_space<vmem>>, vector<4x512xf32>
    %c0_4 = arith.constant 0 : index
    %c0_5 = arith.constant 0 : index
    %6 = vector.load %arg3[%c0_4, %c0_5] : memref<9x512xf32, #tpu.memory_space<vmem>>, vector<4x512xf32>
    %c4 = arith.constant 4 : index
    %c0_6 = arith.constant 0 : index
    %7 = vector.load %arg3[%c4, %c0_6] : memref<9x512xf32, #tpu.memory_space<vmem>>, vector<4x512xf32>
    %c8 = arith.constant 8 : index
    %c0_7 = arith.constant 0 : index
    %8 = vector.load %arg3[%c8, %c0_7] : memref<9x512xf32, #tpu.memory_space<vmem>>, vector<1x512xf32>
    %c0_8 = arith.constant 0 : index
    %c0_9 = arith.constant 0 : index
    %9 = vector.load %arg4[%c0_8, %c0_9] : memref<20x512xf32, #tpu.memory_space<vmem>>, vector<4x512xf32>
    %c4_10 = arith.constant 4 : index
    %c0_11 = arith.constant 0 : index
    %10 = vector.load %arg4[%c4_10, %c0_11] : memref<20x512xf32, #tpu.memory_space<vmem>>, vector<2x512xf32>
    %c6 = arith.constant 6 : index
    %c0_12 = arith.constant 0 : index
    %11 = vector.load %arg4[%c6, %c0_12] : memref<20x512xf32, #tpu.memory_space<vmem>>, vector<2x512xf32>
    %c8_13 = arith.constant 8 : index
    %c0_14 = arith.constant 0 : index
    %12 = vector.load %arg4[%c8_13, %c0_14] : memref<20x512xf32, #tpu.memory_space<vmem>>, vector<4x512xf32>
    %c12 = arith.constant 12 : index
    %c0_15 = arith.constant 0 : index
    %13 = vector.load %arg4[%c12, %c0_15] : memref<20x512xf32, #tpu.memory_space<vmem>>, vector<1x512xf32>
    %c13 = arith.constant 13 : index
    %c0_16 = arith.constant 0 : index
    %14 = vector.load %arg4[%c13, %c0_16] : memref<20x512xf32, #tpu.memory_space<vmem>>, vector<1x512xf32>
    %c14 = arith.constant 14 : index
    %c0_17 = arith.constant 0 : index
    %15 = vector.load %arg4[%c14, %c0_17] : memref<20x512xf32, #tpu.memory_space<vmem>>, vector<1x512xf32>
    %c16 = arith.constant 16 : index
    %c0_18 = arith.constant 0 : index
    %16 = vector.load %arg4[%c16, %c0_18] : memref<20x512xf32, #tpu.memory_space<vmem>>, vector<4x512xf32>
    %17 = arith.mulf %14, %15 : vector<1x512xf32>
    %18 = vector.extract_strided_slice %6 {offsets = [0, 0], sizes = [2, 512], strides = [1, 1]} : vector<4x512xf32> to vector<2x512xf32>
    %19 = vector.extract_strided_slice %6 {offsets = [2, 0], sizes = [2, 512], strides = [1, 1]} : vector<4x512xf32> to vector<2x512xf32>
    %cst = arith.constant 5.000000e-01 : f32
    %20 = vector.broadcast %cst : f32 to vector<2x512xf32>
    %21 = arith.mulf %19, %20 : vector<2x512xf32>
    %22 = arith.subf %18, %21 : vector<2x512xf32>
    %23 = vector.extract_strided_slice %6 {offsets = [0, 0], sizes = [2, 512], strides = [1, 1]} : vector<4x512xf32> to vector<2x512xf32>
    %24 = vector.extract_strided_slice %6 {offsets = [2, 0], sizes = [2, 512], strides = [1, 1]} : vector<4x512xf32> to vector<2x512xf32>
    %cst_19 = arith.constant 5.000000e-01 : f32
    %25 = vector.broadcast %cst_19 : f32 to vector<2x512xf32>
    %26 = arith.mulf %24, %25 : vector<2x512xf32>
    %27 = arith.addf %23, %26 : vector<2x512xf32>
    %28 = vector.extract_strided_slice %9 {offsets = [0, 0], sizes = [2, 512], strides = [1, 1]} : vector<4x512xf32> to vector<2x512xf32>
    %29 = vector.extract_strided_slice %9 {offsets = [2, 0], sizes = [2, 512], strides = [1, 1]} : vector<4x512xf32> to vector<2x512xf32>
    %cst_20 = arith.constant 5.000000e-01 : f32
    %30 = vector.broadcast %cst_20 : f32 to vector<2x512xf32>
    %31 = arith.mulf %29, %30 : vector<2x512xf32>
    %32 = arith.subf %28, %31 : vector<2x512xf32>
    %33 = vector.extract_strided_slice %9 {offsets = [0, 0], sizes = [2, 512], strides = [1, 1]} : vector<4x512xf32> to vector<2x512xf32>
    %34 = vector.extract_strided_slice %9 {offsets = [2, 0], sizes = [2, 512], strides = [1, 1]} : vector<4x512xf32> to vector<2x512xf32>
    %cst_21 = arith.constant 5.000000e-01 : f32
    %35 = vector.broadcast %cst_21 : f32 to vector<2x512xf32>
    %36 = arith.mulf %34, %35 : vector<2x512xf32>
    %37 = arith.addf %33, %36 : vector<2x512xf32>
    %38 = arith.minimumf %22, %27 : vector<2x512xf32>
    %39 = arith.maximumf %22, %27 : vector<2x512xf32>
    %40 = arith.minimumf %32, %37 : vector<2x512xf32>
    %41 = arith.maximumf %32, %37 : vector<2x512xf32>
    %42 = arith.subf %39, %38 : vector<2x512xf32>
    %43 = arith.subf %41, %40 : vector<2x512xf32>
    %44 = vector.extract_strided_slice %42 {offsets = [0, 0], sizes = [1, 512], strides = [1, 1]} : vector<2x512xf32> to vector<1x512xf32>
    %45 = vector.extract_strided_slice %42 {offsets = [1, 0], sizes = [1, 512], strides = [1, 1]} : vector<2x512xf32> to vector<1x512xf32>
    %46 = arith.mulf %44, %45 : vector<1x512xf32>
    %47 = vector.extract_strided_slice %43 {offsets = [0, 0], sizes = [1, 512], strides = [1, 1]} : vector<2x512xf32> to vector<1x512xf32>
    %48 = vector.extract_strided_slice %43 {offsets = [1, 0], sizes = [1, 512], strides = [1, 1]} : vector<2x512xf32> to vector<1x512xf32>
    %49 = arith.mulf %47, %48 : vector<1x512xf32>
    %50 = arith.maximumf %38, %40 : vector<2x512xf32>
    %51 = arith.minimumf %39, %41 : vector<2x512xf32>
    %52 = arith.subf %51, %50 : vector<2x512xf32>
    %cst_22 = arith.constant 0.000000e+00 : f32
    %53 = vector.broadcast %cst_22 : f32 to vector<2x512xf32>
    %54 = arith.maximumf %52, %53 : vector<2x512xf32>
    %55 = vector.extract_strided_slice %54 {offsets = [0, 0], sizes = [1, 512], strides = [1, 1]} : vector<2x512xf32> to vector<1x512xf32>
    %56 = vector.extract_strided_slice %54 {offsets = [1, 0], sizes = [1, 512], strides = [1, 1]} : vector<2x512xf32> to vector<1x512xf32>
    %57 = arith.mulf %55, %56 : vector<1x512xf32>
    %58 = arith.addf %46, %49 : vector<1x512xf32>
    %59 = arith.subf %58, %57 : vector<1x512xf32>
    %60 = arith.minimumf %38, %40 : vector<2x512xf32>
    %61 = arith.maximumf %39, %41 : vector<2x512xf32>
    %62 = arith.subf %61, %60 : vector<2x512xf32>
    %cst_23 = arith.constant 0.000000e+00 : f32
    %63 = vector.broadcast %cst_23 : f32 to vector<2x512xf32>
    %64 = arith.maximumf %62, %63 : vector<2x512xf32>
    %65 = vector.extract_strided_slice %64 {offsets = [0, 0], sizes = [1, 512], strides = [1, 1]} : vector<2x512xf32> to vector<1x512xf32>
    %66 = vector.extract_strided_slice %64 {offsets = [1, 0], sizes = [1, 512], strides = [1, 1]} : vector<2x512xf32> to vector<1x512xf32>
    %67 = arith.mulf %65, %66 : vector<1x512xf32>
    %cst_24 = arith.constant 9.99999971E-10 : f32
    %68 = vector.broadcast %cst_24 : f32 to vector<1x512xf32>
    %69 = arith.maximumf %59, %68 : vector<1x512xf32>
    %70 = tpu.reciprocal %69 {approx = true} : vector<1x512xf32> -> vector<1x512xf32>
    %cst_25 = arith.constant 9.99999971E-10 : f32
    %71 = vector.broadcast %cst_25 : f32 to vector<1x512xf32>
    %72 = arith.maximumf %67, %71 : vector<1x512xf32>
    %73 = tpu.reciprocal %72 {approx = true} : vector<1x512xf32> -> vector<1x512xf32>
    %74 = arith.mulf %57, %70 : vector<1x512xf32>
    %75 = arith.subf %67, %59 : vector<1x512xf32>
    %76 = arith.mulf %75, %73 : vector<1x512xf32>
    %77 = arith.subf %74, %76 : vector<1x512xf32>
    %78 = vector.extract_strided_slice %9 {offsets = [2, 0], sizes = [1, 512], strides = [1, 1]} : vector<4x512xf32> to vector<1x512xf32>
    %cst_26 = arith.constant 1.000000e+00 : f32
    %79 = vector.broadcast %cst_26 : f32 to vector<1x512xf32>
    %80 = arith.mulf %79, %78 : vector<1x512xf32>
    %81 = vector.extract_strided_slice %9 {offsets = [3, 0], sizes = [1, 512], strides = [1, 1]} : vector<4x512xf32> to vector<1x512xf32>
    %82 = arith.mulf %80, %81 : vector<1x512xf32>
    %cst_27 = arith.constant 2.44140625E-4 : f32
    %83 = vector.broadcast %cst_27 : f32 to vector<1x512xf32>
    %84 = arith.mulf %82, %83 : vector<1x512xf32>
    %cst_28 = arith.constant 2.000000e+00 : f32
    %85 = vector.broadcast %cst_28 : f32 to vector<1x512xf32>
    %86 = arith.subf %85, %84 : vector<1x512xf32>
    %cst_29 = arith.constant 1.000000e+00 : f32
    %87 = vector.broadcast %cst_29 : f32 to vector<1x512xf32>
    %88 = arith.subf %87, %77 : vector<1x512xf32>
    %89 = arith.mulf %86, %88 : vector<1x512xf32>
    %90 = arith.mulf %89, %17 : vector<1x512xf32>
    %91 = math.absf %3 : vector<2x512xf32>
    %cst_30 = arith.constant 0.000000e+00 : f32
    %92 = vector.broadcast %cst_30 : f32 to vector<2x512xf32>
    %93 = arith.subf %92, %91 : vector<2x512xf32>
    %94 = math.exp %93 : vector<2x512xf32>
    %cst_31 = arith.constant 0.000000e+00 : f32
    %95 = vector.broadcast %cst_31 : f32 to vector<2x512xf32>
    %96 = arith.cmpf oge, %3, %95 : vector<2x512xf32>
    %cst_32 = arith.constant 1.000000e+00 : f32
    %97 = vector.broadcast %cst_32 : f32 to vector<2x512xf32>
    %98 = arith.select %96, %97, %94 : vector<2x512xi1>, vector<2x512xf32>
    %cst_33 = arith.constant 1.000000e+00 : f32
    %99 = vector.broadcast %cst_33 : f32 to vector<2x512xf32>
    %100 = arith.addf %99, %94 : vector<2x512xf32>
    %101 = arith.divf %98, %100 : vector<2x512xf32>
    %cst_34 = arith.constant 1.050000e+00 : f32
    %102 = vector.broadcast %cst_34 : f32 to vector<2x512xf32>
    %103 = arith.mulf %101, %102 : vector<2x512xf32>
    %cst_35 = arith.constant 2.500000e-02 : f32
    %104 = vector.broadcast %cst_35 : f32 to vector<2x512xf32>
    %105 = arith.subf %103, %104 : vector<2x512xf32>
    %106 = math.absf %105 : vector<2x512xf32>
    %cst_36 = arith.constant 0.000000e+00 : f32
    %107 = vector.broadcast %cst_36 : f32 to vector<2x512xf32>
    %108 = arith.subf %107, %106 : vector<2x512xf32>
    %109 = math.exp %108 : vector<2x512xf32>
    %cst_37 = arith.constant 0.000000e+00 : f32
    %110 = vector.broadcast %cst_37 : f32 to vector<2x512xf32>
    %111 = arith.maximumf %105, %110 : vector<2x512xf32>
    %112 = arith.mulf %105, %10 : vector<2x512xf32>
    %113 = arith.subf %111, %112 : vector<2x512xf32>
    %cst_38 = arith.constant 1.000000e+00 : f32
    %114 = vector.broadcast %cst_38 : f32 to vector<2x512xf32>
    %115 = arith.addf %114, %109 : vector<2x512xf32>
    %116 = math.log %115 : vector<2x512xf32>
    %117 = arith.addf %113, %116 : vector<2x512xf32>
    %118 = vector.extract_strided_slice %117 {offsets = [0, 0], sizes = [1, 512], strides = [1, 1]} : vector<2x512xf32> to vector<1x512xf32>
    %119 = vector.extract_strided_slice %117 {offsets = [1, 0], sizes = [1, 512], strides = [1, 1]} : vector<2x512xf32> to vector<1x512xf32>
    %120 = arith.addf %118, %119 : vector<1x512xf32>
    %121 = arith.mulf %120, %17 : vector<1x512xf32>
    %122 = arith.subf %4, %11 : vector<2x512xf32>
    %123 = math.absf %122 : vector<2x512xf32>
    %cst_39 = arith.constant 1.000000e+00 : f32
    %124 = vector.broadcast %cst_39 : f32 to vector<2x512xf32>
    %125 = arith.cmpf olt, %123, %124 : vector<2x512xf32>
    %cst_40 = arith.constant 5.000000e-01 : f32
    %126 = vector.broadcast %cst_40 : f32 to vector<2x512xf32>
    %127 = arith.mulf %126, %123 : vector<2x512xf32>
    %128 = arith.mulf %127, %123 : vector<2x512xf32>
    %cst_41 = arith.constant 5.000000e-01 : f32
    %129 = vector.broadcast %cst_41 : f32 to vector<2x512xf32>
    %130 = arith.subf %123, %129 : vector<2x512xf32>
    %131 = arith.select %125, %128, %130 : vector<2x512xi1>, vector<2x512xf32>
    %132 = vector.extract_strided_slice %131 {offsets = [0, 0], sizes = [1, 512], strides = [1, 1]} : vector<2x512xf32> to vector<1x512xf32>
    %133 = vector.extract_strided_slice %131 {offsets = [1, 0], sizes = [1, 512], strides = [1, 1]} : vector<2x512xf32> to vector<1x512xf32>
    %134 = arith.addf %132, %133 : vector<1x512xf32>
    %135 = arith.mulf %86, %17 : vector<1x512xf32>
    %136 = arith.mulf %134, %135 : vector<1x512xf32>
    %137 = arith.subf %7, %12 : vector<4x512xf32>
    %138 = math.absf %137 : vector<4x512xf32>
    %cst_42 = arith.constant 0.111111112 : f32
    %139 = vector.broadcast %cst_42 : f32 to vector<4x512xf32>
    %140 = arith.cmpf olt, %138, %139 : vector<4x512xf32>
    %cst_43 = arith.constant 4.500000e+00 : f32
    %141 = vector.broadcast %cst_43 : f32 to vector<4x512xf32>
    %142 = arith.mulf %141, %138 : vector<4x512xf32>
    %143 = arith.mulf %142, %138 : vector<4x512xf32>
    %cst_44 = arith.constant 0.055555556 : f32
    %144 = vector.broadcast %cst_44 : f32 to vector<4x512xf32>
    %145 = arith.subf %138, %144 : vector<4x512xf32>
    %146 = arith.select %140, %143, %145 : vector<4x512xi1>, vector<4x512xf32>
    %147 = vector.extract_strided_slice %146 {offsets = [0, 0], sizes = [1, 512], strides = [1, 1]} : vector<4x512xf32> to vector<1x512xf32>
    %148 = vector.extract_strided_slice %146 {offsets = [1, 0], sizes = [1, 512], strides = [1, 1]} : vector<4x512xf32> to vector<1x512xf32>
    %149 = arith.addf %147, %148 : vector<1x512xf32>
    %150 = vector.extract_strided_slice %146 {offsets = [2, 0], sizes = [1, 512], strides = [1, 1]} : vector<4x512xf32> to vector<1x512xf32>
    %151 = arith.addf %149, %150 : vector<1x512xf32>
    %152 = vector.extract_strided_slice %146 {offsets = [3, 0], sizes = [1, 512], strides = [1, 1]} : vector<4x512xf32> to vector<1x512xf32>
    %153 = arith.addf %151, %152 : vector<1x512xf32>
    %154 = arith.mulf %153, %17 : vector<1x512xf32>
    %155 = arith.subf %8, %13 : vector<1x512xf32>
    %156 = math.absf %155 : vector<1x512xf32>
    %cst_45 = arith.constant 0.111111112 : f32
    %157 = vector.broadcast %cst_45 : f32 to vector<1x512xf32>
    %158 = arith.cmpf olt, %156, %157 : vector<1x512xf32>
    %cst_46 = arith.constant 4.500000e+00 : f32
    %159 = vector.broadcast %cst_46 : f32 to vector<1x512xf32>
    %160 = arith.mulf %159, %156 : vector<1x512xf32>
    %161 = arith.mulf %160, %156 : vector<1x512xf32>
    %cst_47 = arith.constant 0.055555556 : f32
    %162 = vector.broadcast %cst_47 : f32 to vector<1x512xf32>
    %163 = arith.subf %156, %162 : vector<1x512xf32>
    %164 = arith.select %158, %161, %163 : vector<1x512xi1>, vector<1x512xf32>
    %165 = arith.mulf %164, %17 : vector<1x512xf32>
    %166 = math.absf %5 : vector<4x512xf32>
    %cst_48 = arith.constant 0.000000e+00 : f32
    %167 = vector.broadcast %cst_48 : f32 to vector<4x512xf32>
    %168 = arith.subf %167, %166 : vector<4x512xf32>
    %169 = math.exp %168 : vector<4x512xf32>
    %cst_49 = arith.constant 1.000000e+00 : f32
    %170 = vector.broadcast %cst_49 : f32 to vector<4x512xf32>
    %171 = arith.addf %170, %169 : vector<4x512xf32>
    %172 = math.log %171 : vector<4x512xf32>
    %cst_50 = arith.constant 0.000000e+00 : f32
    %173 = vector.broadcast %cst_50 : f32 to vector<4x512xf32>
    %174 = arith.cmpf oge, %5, %173 : vector<4x512xf32>
    %cst_51 = arith.constant 1.000000e+00 : f32
    %175 = vector.broadcast %cst_51 : f32 to vector<4x512xf32>
    %176 = arith.select %174, %175, %169 : vector<4x512xi1>, vector<4x512xf32>
    %cst_52 = arith.constant 1.000000e+00 : f32
    %177 = vector.broadcast %cst_52 : f32 to vector<4x512xf32>
    %178 = arith.addf %177, %169 : vector<4x512xf32>
    %179 = arith.divf %176, %178 : vector<4x512xf32>
    %cst_53 = arith.constant 0.000000e+00 : f32
    %180 = vector.broadcast %cst_53 : f32 to vector<4x512xf32>
    %181 = arith.minimumf %5, %180 : vector<4x512xf32>
    %182 = arith.subf %181, %172 : vector<4x512xf32>
    %cst_54 = arith.constant 0.000000e+00 : f32
    %183 = vector.broadcast %cst_54 : f32 to vector<4x512xf32>
    %184 = arith.maximumf %5, %183 : vector<4x512xf32>
    %cst_55 = arith.constant 0.000000e+00 : f32
    %185 = vector.broadcast %cst_55 : f32 to vector<4x512xf32>
    %186 = arith.subf %185, %184 : vector<4x512xf32>
    %187 = arith.subf %186, %172 : vector<4x512xf32>
    %cst_56 = arith.constant 1.000000e+00 : f32
    %188 = vector.broadcast %cst_56 : f32 to vector<4x512xf32>
    %189 = arith.cmpf oeq, %16, %188 : vector<4x512xf32>
    %190 = arith.extui %189 : vector<4x512xi1> to vector<4x512xi32>
    %191 = arith.sitofp %190 : vector<4x512xi32> to vector<4x512xf32>
    %cst_57 = arith.constant 9.900000e-01 : f32
    %192 = vector.broadcast %cst_57 : f32 to vector<4x512xf32>
    %193 = arith.mulf %16, %192 : vector<4x512xf32>
    %cst_58 = arith.constant 2.500000e-03 : f32
    %194 = vector.broadcast %cst_58 : f32 to vector<4x512xf32>
    %195 = arith.addf %193, %194 : vector<4x512xf32>
    %cst_59 = arith.constant 1.000000e+00 : f32
    %196 = vector.broadcast %cst_59 : f32 to vector<4x512xf32>
    %197 = arith.subf %196, %179 : vector<4x512xf32>
    %cst_60 = arith.constant 1.000000e+00 : f32
    %198 = vector.broadcast %cst_60 : f32 to vector<4x512xf32>
    %199 = arith.subf %198, %195 : vector<4x512xf32>
    %200 = arith.mulf %199, %199 : vector<4x512xf32>
    %cst_61 = arith.constant 0.000000e+00 : f32
    %201 = vector.broadcast %cst_61 : f32 to vector<4x512xf32>
    %202 = arith.subf %201, %191 : vector<4x512xf32>
    %203 = arith.mulf %202, %195 : vector<4x512xf32>
    %204 = arith.mulf %197, %197 : vector<4x512xf32>
    %205 = arith.mulf %203, %204 : vector<4x512xf32>
    %206 = arith.mulf %205, %182 : vector<4x512xf32>
    %cst_62 = arith.constant 5.000000e+00 : f32
    %207 = vector.broadcast %cst_62 : f32 to vector<4x512xf32>
    %208 = arith.mulf %206, %207 : vector<4x512xf32>
    %cst_63 = arith.constant 1.000000e+00 : f32
    %209 = vector.broadcast %cst_63 : f32 to vector<4x512xf32>
    %210 = arith.subf %209, %191 : vector<4x512xf32>
    %211 = arith.mulf %200, %200 : vector<4x512xf32>
    %212 = arith.mulf %210, %211 : vector<4x512xf32>
    %213 = arith.mulf %179, %179 : vector<4x512xf32>
    %214 = arith.mulf %212, %213 : vector<4x512xf32>
    %215 = arith.mulf %214, %187 : vector<4x512xf32>
    %216 = arith.subf %208, %215 : vector<4x512xf32>
    %217 = vector.extract_strided_slice %216 {offsets = [0, 0], sizes = [1, 512], strides = [1, 1]} : vector<4x512xf32> to vector<1x512xf32>
    %218 = vector.extract_strided_slice %216 {offsets = [1, 0], sizes = [1, 512], strides = [1, 1]} : vector<4x512xf32> to vector<1x512xf32>
    %219 = arith.addf %217, %218 : vector<1x512xf32>
    %220 = vector.extract_strided_slice %216 {offsets = [2, 0], sizes = [1, 512], strides = [1, 1]} : vector<4x512xf32> to vector<1x512xf32>
    %221 = arith.addf %219, %220 : vector<1x512xf32>
    %222 = vector.extract_strided_slice %216 {offsets = [3, 0], sizes = [1, 512], strides = [1, 1]} : vector<4x512xf32> to vector<1x512xf32>
    %223 = arith.addf %221, %222 : vector<1x512xf32>
    %224 = vector.extract_strided_slice %90 {offsets = [0, 0], sizes = [1, 128], strides = [1, 1]} : vector<1x512xf32> to vector<1x128xf32>
    %225 = vector.extract_strided_slice %90 {offsets = [0, 128], sizes = [1, 128], strides = [1, 1]} : vector<1x512xf32> to vector<1x128xf32>
    %226 = arith.addf %224, %225 : vector<1x128xf32>
    %227 = vector.extract_strided_slice %90 {offsets = [0, 256], sizes = [1, 128], strides = [1, 1]} : vector<1x512xf32> to vector<1x128xf32>
    %228 = arith.addf %226, %227 : vector<1x128xf32>
    %229 = vector.extract_strided_slice %90 {offsets = [0, 384], sizes = [1, 128], strides = [1, 1]} : vector<1x512xf32> to vector<1x128xf32>
    %230 = arith.addf %228, %229 : vector<1x128xf32>
    %231 = vector.extract_strided_slice %223 {offsets = [0, 0], sizes = [1, 128], strides = [1, 1]} : vector<1x512xf32> to vector<1x128xf32>
    %232 = vector.extract_strided_slice %223 {offsets = [0, 128], sizes = [1, 128], strides = [1, 1]} : vector<1x512xf32> to vector<1x128xf32>
    %233 = arith.addf %231, %232 : vector<1x128xf32>
    %234 = vector.extract_strided_slice %223 {offsets = [0, 256], sizes = [1, 128], strides = [1, 1]} : vector<1x512xf32> to vector<1x128xf32>
    %235 = arith.addf %233, %234 : vector<1x128xf32>
    %236 = vector.extract_strided_slice %223 {offsets = [0, 384], sizes = [1, 128], strides = [1, 1]} : vector<1x512xf32> to vector<1x128xf32>
    %237 = arith.addf %235, %236 : vector<1x128xf32>
    %238 = vector.extract_strided_slice %154 {offsets = [0, 0], sizes = [1, 128], strides = [1, 1]} : vector<1x512xf32> to vector<1x128xf32>
    %239 = vector.extract_strided_slice %154 {offsets = [0, 128], sizes = [1, 128], strides = [1, 1]} : vector<1x512xf32> to vector<1x128xf32>
    %240 = arith.addf %238, %239 : vector<1x128xf32>
    %241 = vector.extract_strided_slice %154 {offsets = [0, 256], sizes = [1, 128], strides = [1, 1]} : vector<1x512xf32> to vector<1x128xf32>
    %242 = arith.addf %240, %241 : vector<1x128xf32>
    %243 = vector.extract_strided_slice %154 {offsets = [0, 384], sizes = [1, 128], strides = [1, 1]} : vector<1x512xf32> to vector<1x128xf32>
    %244 = arith.addf %242, %243 : vector<1x128xf32>
    %245 = vector.extract_strided_slice %165 {offsets = [0, 0], sizes = [1, 128], strides = [1, 1]} : vector<1x512xf32> to vector<1x128xf32>
    %246 = vector.extract_strided_slice %165 {offsets = [0, 128], sizes = [1, 128], strides = [1, 1]} : vector<1x512xf32> to vector<1x128xf32>
    %247 = arith.addf %245, %246 : vector<1x128xf32>
    %248 = vector.extract_strided_slice %165 {offsets = [0, 256], sizes = [1, 128], strides = [1, 1]} : vector<1x512xf32> to vector<1x128xf32>
    %249 = arith.addf %247, %248 : vector<1x128xf32>
    %250 = vector.extract_strided_slice %165 {offsets = [0, 384], sizes = [1, 128], strides = [1, 1]} : vector<1x512xf32> to vector<1x128xf32>
    %251 = arith.addf %249, %250 : vector<1x128xf32>
    %252 = vector.extract_strided_slice %121 {offsets = [0, 0], sizes = [1, 128], strides = [1, 1]} : vector<1x512xf32> to vector<1x128xf32>
    %253 = vector.extract_strided_slice %121 {offsets = [0, 128], sizes = [1, 128], strides = [1, 1]} : vector<1x512xf32> to vector<1x128xf32>
    %254 = arith.addf %252, %253 : vector<1x128xf32>
    %255 = vector.extract_strided_slice %121 {offsets = [0, 256], sizes = [1, 128], strides = [1, 1]} : vector<1x512xf32> to vector<1x128xf32>
    %256 = arith.addf %254, %255 : vector<1x128xf32>
    %257 = vector.extract_strided_slice %121 {offsets = [0, 384], sizes = [1, 128], strides = [1, 1]} : vector<1x512xf32> to vector<1x128xf32>
    %258 = arith.addf %256, %257 : vector<1x128xf32>
    %259 = vector.extract_strided_slice %136 {offsets = [0, 0], sizes = [1, 128], strides = [1, 1]} : vector<1x512xf32> to vector<1x128xf32>
    %260 = vector.extract_strided_slice %136 {offsets = [0, 128], sizes = [1, 128], strides = [1, 1]} : vector<1x512xf32> to vector<1x128xf32>
    %261 = arith.addf %259, %260 : vector<1x128xf32>
    %262 = vector.extract_strided_slice %136 {offsets = [0, 256], sizes = [1, 128], strides = [1, 1]} : vector<1x512xf32> to vector<1x128xf32>
    %263 = arith.addf %261, %262 : vector<1x128xf32>
    %264 = vector.extract_strided_slice %136 {offsets = [0, 384], sizes = [1, 128], strides = [1, 1]} : vector<1x512xf32> to vector<1x128xf32>
    %265 = arith.addf %263, %264 : vector<1x128xf32>
    %cst_64 = arith.constant 0.000000e+00 : f32
    %266 = vector.broadcast %cst_64 : f32 to vector<2x128xf32>
    %267 = tpu.concatenate %230, %237, %244, %251, %258, %265, %266 in 0 : vector<1x128xf32>, vector<1x128xf32>, vector<1x128xf32>, vector<1x128xf32>, vector<1x128xf32>, vector<1x128xf32>, vector<2x128xf32> -> vector<8x128xf32>
    %c0_65 = arith.constant 0 : index
    %c0_66 = arith.constant 0 : index
    %268 = vector.load %arg5[%c0_65, %c0_66] : memref<8x128xf32, #tpu.memory_space<vmem>>, vector<8x128xf32>
    %269 = arith.addf %268, %267 : vector<8x128xf32>
    %c0_67 = arith.constant 0 : index
    %c0_68 = arith.constant 0 : index
    %270 = vector.load %arg5[%c0_67, %c0_68] : memref<8x128xf32, #tpu.memory_space<vmem>>, vector<8x128xf32>
    tpu.vector_store %arg5[%c0_67, %c0_68], %269 {strides = array<i32>} : memref<8x128xf32, #tpu.memory_space<vmem>>, vector<8x128xf32>,
    return
  }
  func.func @transform_0(%arg0: i32, %arg1: i32) -> (i32, i32) {
    %c1_i32 = arith.constant 1 : i32
    %0 = arith.muli %arg0, %c1_i32 : i32
    %1 = arith.addi %0, %arg1 : i32
    %c0_i32 = arith.constant 0 : i32
    %2 = arith.minsi %1, %c0_i32 : i32
    %c0_i32_0 = arith.constant 0 : i32
    %c0_i32_1 = arith.constant 0 : i32
    return %c0_i32_0, %2 : i32, i32
  }
  func.func @transform_1(%arg0: i32, %arg1: i32) -> (i32, i32) {
    %c1_i32 = arith.constant 1 : i32
    %0 = arith.muli %arg0, %c1_i32 : i32
    %1 = arith.addi %0, %arg1 : i32
    %c0_i32 = arith.constant 0 : i32
    %2 = arith.minsi %1, %c0_i32 : i32
    %c0_i32_0 = arith.constant 0 : i32
    %c0_i32_1 = arith.constant 0 : i32
    return %c0_i32_0, %2 : i32, i32
  }
  func.func @transform_2(%arg0: i32, %arg1: i32) -> (i32, i32) {
    %c1_i32 = arith.constant 1 : i32
    %0 = arith.muli %arg0, %c1_i32 : i32
    %1 = arith.addi %0, %arg1 : i32
    %c0_i32 = arith.constant 0 : i32
    %2 = arith.minsi %1, %c0_i32 : i32
    %c0_i32_0 = arith.constant 0 : i32
    %c0_i32_1 = arith.constant 0 : i32
    return %c0_i32_0, %2 : i32, i32
  }
  func.func @transform_3(%arg0: i32, %arg1: i32) -> (i32, i32) {
    %c0_i32 = arith.constant 0 : i32
    %c0_i32_0 = arith.constant 0 : i32
    return %arg0, %c0_i32 : i32, i32
  }
}

</mosaic_0001>

<llo_original>
// kernel: gghl_centernet_loss.1
$region0: #{gghl_centernet_loss.1}
  #allocation0 [shape = 'u32[]', space=smem, size = 0x4, offset = 0x4, fixed_abs, tag = 'smem constant byte address 0x4 - core index']
  #allocation1 [shape = 'u32[144,128]{1,0:T(1,128)}', space=vmem, size = 0x12000, scoped, tag = 'internal scratch']
  %s0 = inlined_call_operand.vmem [shape: f32[13,512], index: 0, kind: input, shape index: {}]
  %s1 = inlined_call_operand.vmem [shape: f32[9,512], index: 1, kind: input, shape index: {}]
  %s2 = inlined_call_operand.vmem [shape: f32[20,512], index: 2, kind: input, shape index: {}]
  %s3 = inlined_call_operand.vmem [shape: f32[8,128], index: 3, kind: output, shape index: {}]
  %s4 = sld [smem:[#allocation0]]
  $region26: #{gghl_centernet_loss.1} parent=0
    _
  %s6 = ssub.s32 1, %s4
  %s7 = scalar_select 0, %s6, %s4
  // Predicated region
  $region2: #{gghl_centernet_loss.1} parent=0 // pred_check
    _
  $region3: #{gghl_centernet_loss.1} parent=0 // pred_check_branch
    %9 = sbr.rel (0) target = $region5
  $region4: #{gghl_centernet_loss.1} parent=0 // pred_region
    %s10 = sadd.s32 0, 0
    %p11 = scmp.lt.s32.totalorder %s10, 0
    %s12 = scalar_select %p11, %s10, 0
    %s13 = smul.u32 4, %s12
    %p14 = scmp.lt.s32.totalorder %s13, 3
    %s15 = scalar_select %p14, %s13, 3
    %s16 = smul.addr %s15, 8
    %s17 = scalar_lea.vmem %s0, %s16
    %s18 = sadd.s32 0, 0
    %p19 = scmp.lt.s32.totalorder %s18, 0
    %s20 = scalar_select %p19, %s18, 0
    %s21 = smul.u32 4, %s20
  $region5: #{gghl_centernet_loss.1} parent=0 // pred_fallthru
    _
  // Predicated region
  $region6: #{gghl_centernet_loss.1} parent=0 // pred_check
    _
  $region7: #{gghl_centernet_loss.1} parent=0 // pred_check_branch
    %23 = sbr.rel (0) target = $region9
  $region8: #{gghl_centernet_loss.1} parent=0 // pred_region
    %s24 = sadd.s32 0, 0
    %p25 = scmp.lt.s32.totalorder %s24, 0
    %s26 = scalar_select %p25, %s24, 0
    %s27 = smul.u32 4, %s26
    %p28 = scmp.lt.s32.totalorder %s27, 3
    %s29 = scalar_select %p28, %s27, 3
    %s30 = smul.addr %s29, 8
    %s31 = scalar_lea.vmem %s1, %s30
    %s32 = sadd.s32 0, 0
    %p33 = scmp.lt.s32.totalorder %s32, 0
    %s34 = scalar_select %p33, %s32, 0
    %s35 = smul.u32 4, %s34
  $region9: #{gghl_centernet_loss.1} parent=0 // pred_fallthru
    _
  // Predicated region
  $region10: #{gghl_centernet_loss.1} parent=0 // pred_check
    _
  $region11: #{gghl_centernet_loss.1} parent=0 // pred_check_branch
    %37 = sbr.rel (0) target = $region13
  $region12: #{gghl_centernet_loss.1} parent=0 // pred_region
    %s38 = sadd.s32 0, 0
    %p39 = scmp.lt.s32.totalorder %s38, 0
    %s40 = scalar_select %p39, %s38, 0
    %s41 = smul.u32 4, %s40
    %p42 = scmp.lt.s32.totalorder %s41, 3
    %s43 = scalar_select %p42, %s41, 3
    %s44 = smul.addr %s43, 8
    %s45 = scalar_lea.vmem %s2, %s44
    %s46 = sadd.s32 0, 0
    %p47 = scmp.lt.s32.totalorder %s46, 0
    %s48 = scalar_select %p47, %s46, 0
    %s49 = smul.u32 4, %s48
  $region13: #{gghl_centernet_loss.1} parent=0 // pred_fallthru
    _
  %s50 = sadd.s32 0, 0
  %p51 = scmp.lt.s32.totalorder %s50, 0
  %s52 = scalar_select %p51, %s50, 0
  %s53 = smul.u32 4, %s52
  %p54 = scmp.lt.s32.totalorder %s53, 3
  %s55 = scalar_select %p54, %s53, 3
  %s56 = smul.addr %s55, 8
  %s57 = scalar_lea.vmem %s0, %s56
  %s58 = sadd.s32 0, 0
  %p59 = scmp.lt.s32.totalorder %s58, 0
  %s60 = scalar_select %p59, %s58, 0
  %s61 = smul.u32 4, %s60
  %p62 = scmp.lt.s32.totalorder %s61, 3
  %s63 = scalar_select %p62, %s61, 3
  %s64 = smul.addr %s63, 8
  %s65 = scalar_lea.vmem %s1, %s64
  %s66 = sadd.s32 0, 0
  %p67 = scmp.lt.s32.totalorder %s66, 0
  %s68 = scalar_select %p67, %s66, 0
  %s69 = smul.u32 4, %s68
  %p70 = scmp.lt.s32.totalorder %s69, 3
  %s71 = scalar_select %p70, %s69, 3
  %s72 = smul.addr %s71, 8
  %s73 = scalar_lea.vmem %s2, %s72
  %s74 = sadd.s32 0, 0
  %p75 = scmp.lt.s32.totalorder %s74, 0
  %s76 = scalar_select %p75, %s74, 0
  %s77 = smul.u32 4, %s76
  %p78 = scmp.lt.s32.totalorder %s77, 3
  %s79 = scalar_select %p78, %s77, 3
  %s80 = smul.addr %s79, 8
  %s81 = scalar_lea.vmem %s0, %s80
  %s82 = sadd.s32 0, 0
  %p83 = scmp.lt.s32.totalorder %s82, 0
  %s84 = scalar_select %p83, %s82, 0
  %s85 = smul.u32 4, %s84
  %s86 = sadd.s32 0, 0
  %p87 = scmp.lt.s32.totalorder %s86, 0
  %s88 = scalar_select %p87, %s86, 0
  %s89 = smul.u32 4, %s88
  %p90 = scmp.lt.s32.totalorder %s89, 3
  %s91 = scalar_select %p90, %s89, 3
  %s92 = smul.addr %s91, 8
  %s93 = scalar_lea.vmem %s1, %s92
  %s94 = sadd.s32 0, 0
  %p95 = scmp.lt.s32.totalorder %s94, 0
  %s96 = scalar_select %p95, %s94, 0
  %s97 = smul.u32 4, %s96
  %s98 = sadd.s32 0, 0
  %p99 = scmp.lt.s32.totalorder %s98, 0
  %s100 = scalar_select %p99, %s98, 0
  %s101 = smul.u32 4, %s100
  %p102 = scmp.lt.s32.totalorder %s101, 3
  %s103 = scalar_select %p102, %s101, 3
  %s104 = smul.addr %s103, 8
  %s105 = scalar_lea.vmem %s2, %s104
  %s106 = sadd.s32 0, 0
  %p107 = scmp.lt.s32.totalorder %s106, 0
  %s108 = scalar_select %p107, %s106, 0
  %s109 = smul.u32 4, %s108
  %p110 = scmp.eq.s32.totalorder 0, 0
  // Predicated region
  $region14: #{gghl_centernet_loss.1} parent=0 // pred_check
    %p111 = pneg %p110
  $region15: #{gghl_centernet_loss.1} parent=0 // pred_check_branch
    %113 = sbr.rel (%p111) target = $region17
  $region16: #{gghl_centernet_loss.1} parent=0 // pred_region
    %114 = vst [vmem:[%s3] sm:$0xff] 0.0
  $region17: #{gghl_centernet_loss.1} parent=0 // pred_fallthru
    _
  %v115 = vld [vmem:[%s81] sm:$0x3]
  %v116 = vld [vmem:[%s81 + $0x8] sm:$0x3]
  %v117 = vld [vmem:[%s81 + $0x10] sm:$0x3]
  %v118 = vld [vmem:[%s81 + $0x18] sm:$0x3]
  %v119 = vld [vmem:[%s81] sm:$0xc]
  %v120 = vld [vmem:[%s81 + $0x8] sm:$0xc]
  %v121 = vld [vmem:[%s81 + $0x10] sm:$0xc]
  %v122 = vld [vmem:[%s81 + $0x18] sm:$0xc]
  %v123 = vld [vmem:[%s81 + $0x20] sm:$0x1e]
  %v124 = vld [vmem:[%s81 + $0x28] sm:$0x1e]
  %v125 = vld [vmem:[%s81 + $0x30] sm:$0x1e]
  %v126 = vld [vmem:[%s81 + $0x38] sm:$0x1e]
  %v127 = vld [vmem:[%s93] sm:$0xf]
  %v128 = vld [vmem:[%s93 + $0x8] sm:$0xf]
  %v129 = vld [vmem:[%s93 + $0x10] sm:$0xf]
  %v130 = vld [vmem:[%s93 + $0x18] sm:$0xf]
  %v131 = vld [vmem:[%s93] sm:$0xf0]
  %v132 = vld [vmem:[%s93 + $0x8] sm:$0xf0]
  %v133 = vld [vmem:[%s93 + $0x10] sm:$0xf0]
  %v134 = vld [vmem:[%s93 + $0x18] sm:$0xf0]
  %s135 = scalar_lea.vmem %s93, 32
  %v136 = vld [vmem:[%s135] ss:$8 sm:$0xf]
  %v137 = vld [vmem:[%s105] sm:$0xf]
  %v138 = vld [vmem:[%s105 + $0x8] sm:$0xf]
  %v139 = vld [vmem:[%s105 + $0x10] sm:$0xf]
  %v140 = vld [vmem:[%s105 + $0x18] sm:$0xf]
  %v141 = vld [vmem:[%s105] sm:$0x30]
  %v142 = vld [vmem:[%s105 + $0x8] sm:$0x30]
  %v143 = vld [vmem:[%s105 + $0x10] sm:$0x30]
  %v144 = vld [vmem:[%s105 + $0x18] sm:$0x30]
  %v145 = vld [vmem:[%s105] sm:$0xc0]
  %v146 = vld [vmem:[%s105 + $0x8] sm:$0xc0]
  %v147 = vld [vmem:[%s105 + $0x10] sm:$0xc0]
  %v148 = vld [vmem:[%s105 + $0x18] sm:$0xc0]
  %v149 = vld [vmem:[%s105 + $0x20] sm:$0xf]
  %v150 = vld [vmem:[%s105 + $0x28] sm:$0xf]
  %v151 = vld [vmem:[%s105 + $0x30] sm:$0xf]
  %v152 = vld [vmem:[%s105 + $0x38] sm:$0xf]
  %s153 = scalar_lea.vmem %s105, 36
  %v154 = vld [vmem:[%s153] ss:$8 sm:$0xf]
  %s155 = scalar_lea.vmem %s105, 37
  %v156 = vld [vmem:[%s155] ss:$8 sm:$0xf]
  %s157 = scalar_lea.vmem %s105, 38
  %v158 = vld [vmem:[%s157] ss:$8 sm:$0xf]
  %v159 = vld [vmem:[%s105 + $0x40] sm:$0xf]
  %v160 = vld [vmem:[%s105 + $0x48] sm:$0xf]
  %v161 = vld [vmem:[%s105 + $0x50] sm:$0xf]
  %v162 = vld [vmem:[%s105 + $0x58] sm:$0xf]
  %v163 = vmul.f32 %v156, %v158
  %v164 = vmul.f32 %v127, 0.5
  %v165 = vmul.f32 %v128, 0.5
  %v166 = vmul.f32 %v129, 0.5
  %v167 = vmul.f32 %v130, 0.5
  %v172 = vrot.slane %v164, 2
  %v173 = vrot.slane %v165, 2
  %v174 = vrot.slane %v166, 2
  %v175 = vrot.slane %v167, 2
  %v180 = vsub.f32 %v127, %v172
  %v181 = vsub.f32 %v128, %v173
  %v182 = vsub.f32 %v129, %v174
  %v183 = vsub.f32 %v130, %v175
  %v184 = vadd.f32 %v127, %v172
  %v185 = vadd.f32 %v128, %v173
  %v186 = vadd.f32 %v129, %v174
  %v187 = vadd.f32 %v130, %v175
  %v188 = vmul.f32 %v137, 0.5
  %v189 = vmul.f32 %v138, 0.5
  %v190 = vmul.f32 %v139, 0.5
  %v191 = vmul.f32 %v140, 0.5
  %v196 = vrot.slane %v188, 2
  %v197 = vrot.slane %v189, 2
  %v198 = vrot.slane %v190, 2
  %v199 = vrot.slane %v191, 2
  %v204 = vsub.f32 %v137, %v196
  %v205 = vsub.f32 %v138, %v197
  %v206 = vsub.f32 %v139, %v198
  %v207 = vsub.f32 %v140, %v199
  %v208 = vadd.f32 %v137, %v196
  %v209 = vadd.f32 %v138, %v197
  %v210 = vadd.f32 %v139, %v198
  %v211 = vadd.f32 %v140, %v199
  %v212 = vmin.f32 %v180, %v184
  %v213 = vmin.f32 %v181, %v185
  %v214 = vmin.f32 %v182, %v186
  %v215 = vmin.f32 %v183, %v187
  %v216 = vmax.f32 %v180, %v184
  %v217 = vmax.f32 %v181, %v185
  %v218 = vmax.f32 %v182, %v186
  %v219 = vmax.f32 %v183, %v187
  %v220 = vmin.f32 %v204, %v208
  %v221 = vmin.f32 %v205, %v209
  %v222 = vmin.f32 %v206, %v210
  %v223 = vmin.f32 %v207, %v211
  %v224 = vmax.f32 %v204, %v208
  %v225 = vmax.f32 %v205, %v209
  %v226 = vmax.f32 %v206, %v210
  %v227 = vmax.f32 %v207, %v211
  %v228 = vsub.f32 %v216, %v212
  %v229 = vsub.f32 %v217, %v213
  %v230 = vsub.f32 %v218, %v214
  %v231 = vsub.f32 %v219, %v215
  %v232 = vsub.f32 %v224, %v220
  %v233 = vsub.f32 %v225, %v221
  %v234 = vsub.f32 %v226, %v222
  %v235 = vsub.f32 %v227, %v223
  %v240 = vrot.slane %v228, 1
  %v241 = vrot.slane %v229, 1
  %v242 = vrot.slane %v230, 1
  %v243 = vrot.slane %v231, 1
  %v248 = vmul.f32 %v228, %v240
  %v249 = vmul.f32 %v229, %v241
  %v250 = vmul.f32 %v230, %v242
  %v251 = vmul.f32 %v231, %v243
  %v256 = vrot.slane %v232, 1
  %v257 = vrot.slane %v233, 1
  %v258 = vrot.slane %v234, 1
  %v259 = vrot.slane %v235, 1
  %v264 = vmul.f32 %v232, %v256
  %v265 = vmul.f32 %v233, %v257
  %v266 = vmul.f32 %v234, %v258
  %v267 = vmul.f32 %v235, %v259
  %v268 = vmax.f32 %v212, %v220
  %v269 = vmax.f32 %v213, %v221
  %v270 = vmax.f32 %v214, %v222
  %v271 = vmax.f32 %v215, %v223
  %v272 = vmin.f32 %v216, %v224
  %v273 = vmin.f32 %v217, %v225
  %v274 = vmin.f32 %v218, %v226
  %v275 = vmin.f32 %v219, %v227
  %v276 = vsub.f32 %v272, %v268
  %v277 = vsub.f32 %v273, %v269
  %v278 = vsub.f32 %v274, %v270
  %v279 = vsub.f32 %v275, %v271
  %v280 = vmax.f32 %v276, 0.0
  %v281 = vmax.f32 %v277, 0.0
  %v282 = vmax.f32 %v278, 0.0
  %v283 = vmax.f32 %v279, 0.0
  %v288 = vrot.slane %v280, 1
  %v289 = vrot.slane %v281, 1
  %v290 = vrot.slane %v282, 1
  %v291 = vrot.slane %v283, 1
  %v296 = vmul.f32 %v280, %v288
  %v297 = vmul.f32 %v281, %v289
  %v298 = vmul.f32 %v282, %v290
  %v299 = vmul.f32 %v283, %v291
  %v300 = vadd.f32 %v248, %v264
  %v301 = vadd.f32 %v249, %v265
  %v302 = vadd.f32 %v250, %v266
  %v303 = vadd.f32 %v251, %v267
  %v304 = vsub.f32 %v300, %v296
  %v305 = vsub.f32 %v301, %v297
  %v306 = vsub.f32 %v302, %v298
  %v307 = vsub.f32 %v303, %v299
  %v308 = vmin.f32 %v212, %v220
  %v309 = vmin.f32 %v213, %v221
  %v310 = vmin.f32 %v214, %v222
  %v311 = vmin.f32 %v215, %v223
  %v312 = vmax.f32 %v216, %v224
  %v313 = vmax.f32 %v217, %v225
  %v314 = vmax.f32 %v218, %v226
  %v315 = vmax.f32 %v219, %v227
  %v316 = vsub.f32 %v312, %v308
  %v317 = vsub.f32 %v313, %v309
  %v318 = vsub.f32 %v314, %v310
  %v319 = vsub.f32 %v315, %v311
  %v320 = vmax.f32 %v316, 0.0
  %v321 = vmax.f32 %v317, 0.0
  %v322 = vmax.f32 %v318, 0.0
  %v323 = vmax.f32 %v319, 0.0
  %v328 = vrot.slane %v320, 1
  %v329 = vrot.slane %v321, 1
  %v330 = vrot.slane %v322, 1
  %v331 = vrot.slane %v323, 1
  %v336 = vmul.f32 %v320, %v328
  %v337 = vmul.f32 %v321, %v329
  %v338 = vmul.f32 %v322, %v330
  %v339 = vmul.f32 %v323, %v331
  %v340 = vmax.f32 %v304, 1e-09
  %v341 = vmax.f32 %v305, 1e-09
  %v342 = vmax.f32 %v306, 1e-09
  %v343 = vmax.f32 %v307, 1e-09
  %v344 = vrcp.pop %v340
  %v345 = vrcp.pop %v341
  %v346 = vrcp.pop %v342
  %v347 = vrcp.pop %v343
  %v348 = vmax.f32 %v336, 1e-09
  %v349 = vmax.f32 %v337, 1e-09
  %v350 = vmax.f32 %v338, 1e-09
  %v351 = vmax.f32 %v339, 1e-09
  %v352 = vrcp.pop %v348
  %v353 = vrcp.pop %v349
  %v354 = vrcp.pop %v350
  %v355 = vrcp.pop %v351
  %v356 = vmul.f32 %v296, %v344
  %v357 = vmul.f32 %v297, %v345
  %v358 = vmul.f32 %v298, %v346
  %v359 = vmul.f32 %v299, %v347
  %v360 = vsub.f32 %v336, %v304
  %v361 = vsub.f32 %v337, %v305
  %v362 = vsub.f32 %v338, %v306
  %v363 = vsub.f32 %v339, %v307
  %v364 = vmul.f32 %v360, %v352
  %v365 = vmul.f32 %v361, %v353
  %v366 = vmul.f32 %v362, %v354
  %v367 = vmul.f32 %v363, %v355
  %v368 = vsub.f32 %v356, %v364
  %v369 = vsub.f32 %v357, %v365
  %v370 = vsub.f32 %v358, %v366
  %v371 = vsub.f32 %v359, %v367
  %v376 = vrot.slane %v137, 1
  %v377 = vrot.slane %v138, 1
  %v378 = vrot.slane %v139, 1
  %v379 = vrot.slane %v140, 1
  %v384 = vmul.f32 %v137, %v376
  %v385 = vmul.f32 %v138, %v377
  %v386 = vmul.f32 %v139, %v378
  %v387 = vmul.f32 %v140, %v379
  %v388 = vmul.f32 %v384, 0.00024414063
  %v389 = vmul.f32 %v385, 0.00024414063
  %v390 = vmul.f32 %v386, 0.00024414063
  %v391 = vmul.f32 %v387, 0.00024414063
  %v392 = vsub.f32 2.0, %v388
  %v393 = vsub.f32 2.0, %v389
  %v394 = vsub.f32 2.0, %v390
  %v395 = vsub.f32 2.0, %v391
  %v396 = vsub.f32 1.0, %v368
  %v397 = vsub.f32 1.0, %v369
  %v398 = vsub.f32 1.0, %v370
  %v399 = vsub.f32 1.0, %v371
  %v404 = vrot.slane %v396, 6
  %v405 = vrot.slane %v397, 6
  %v406 = vrot.slane %v398, 6
  %v407 = vrot.slane %v399, 6
  %v412 = vmul.f32 %v392, %v404
  %v413 = vmul.f32 %v393, %v405
  %v414 = vmul.f32 %v394, %v406
  %v415 = vmul.f32 %v395, %v407
  %v417 = vlaneseq
  %v418 = vshrl.u32 %v417, 7
  %v419 = vsub.s32 0, %v418
  %v420 = vrot.slane %v163, %v419
  %v421 = vlaneseq
  %v422 = vshrl.u32 %v421, 7
  %v423 = vsub.s32 1, %v422
  %v424 = vrot.slane %v163, %v423
  %v425 = vlaneseq
  %v426 = vshrl.u32 %v425, 7
  %v427 = vsub.s32 2, %v426
  %v428 = vrot.slane %v163, %v427
  %v429 = vlaneseq
  %v430 = vshrl.u32 %v429, 7
  %v431 = vsub.s32 3, %v430
  %v432 = vrot.slane %v163, %v431
  %v437 = vmul.f32 %v412, %v420
  %v438 = vmul.f32 %v413, %v424
  %v439 = vmul.f32 %v414, %v428
  %v440 = vmul.f32 %v415, %v432
  %v441 = vand.u32 2147483647, %v115
  %v442 = vand.u32 2147483647, %v116
  %v443 = vand.u32 2147483647, %v117
  %v444 = vand.u32 2147483647, %v118
  %v445 = vsub.f32 0.0, %v441
  %v446 = vsub.f32 0.0, %v442
  %v447 = vsub.f32 0.0, %v443
  %v448 = vsub.f32 0.0, %v444
  %v449 = vmul.f32 %v445, 1.442695
  %v450 = vpow.pop %v449
  %v451 = vmul.f32 %v446, 1.442695
  %v452 = vpow.pop %v451
  %v453 = vmul.f32 %v447, 1.442695
  %v454 = vpow.pop %v453
  %v455 = vmul.f32 %v448, 1.442695
  %v456 = vpow.pop %v455
  %vm457 = vcmp.ge.f32.partialorder %v115, 0.0
  %vm458 = vcmp.ge.f32.partialorder %v116, 0.0
  %vm459 = vcmp.ge.f32.partialorder %v117, 0.0
  %vm460 = vcmp.ge.f32.partialorder %v118, 0.0
  %v461 = vsel %vm457, 1.0, %v450
  %v462 = vsel %vm458, 1.0, %v452
  %v463 = vsel %vm459, 1.0, %v454
  %v464 = vsel %vm460, 1.0, %v456
  %v465 = vadd.f32 %v450, 1.0
  %v466 = vadd.f32 %v452, 1.0
  %v467 = vadd.f32 %v454, 1.0
  %v468 = vadd.f32 %v456, 1.0
  %v469 = vrcp.pop %v465
  %v470 = vmul.f32 %v461, %v469
  %v471 = vrcp.pop %v466
  %v472 = vmul.f32 %v462, %v471
  %v473 = vrcp.pop %v467
  %v474 = vmul.f32 %v463, %v473
  %v475 = vrcp.pop %v468
  %v476 = vmul.f32 %v464, %v475
  %v477 = vmul.f32 %v470, 1.05
  %v478 = vmul.f32 %v472, 1.05
  %v479 = vmul.f32 %v474, 1.05
  %v480 = vmul.f32 %v476, 1.05
  %v481 = vsub.f32 %v477, 0.025
  %v482 = vsub.f32 %v478, 0.025
  %v483 = vsub.f32 %v479, 0.025
  %v484 = vsub.f32 %v480, 0.025
  %v485 = vand.u32 2147483647, %v481
  %v486 = vand.u32 2147483647, %v482
  %v487 = vand.u32 2147483647, %v483
  %v488 = vand.u32 2147483647, %v484
  %v489 = vsub.f32 0.0, %v485
  %v490 = vsub.f32 0.0, %v486
  %v491 = vsub.f32 0.0, %v487
  %v492 = vsub.f32 0.0, %v488
  %v493 = vmul.f32 %v489, 1.442695
  %v494 = vpow.pop %v493
  %v495 = vmul.f32 %v490, 1.442695
  %v496 = vpow.pop %v495
  %v497 = vmul.f32 %v491, 1.442695
  %v498 = vpow.pop %v497
  %v499 = vmul.f32 %v492, 1.442695
  %v500 = vpow.pop %v499
  %v501 = vmax.f32 %v481, 0.0
  %v502 = vmax.f32 %v482, 0.0
  %v503 = vmax.f32 %v483, 0.0
  %v504 = vmax.f32 %v484, 0.0
  %v509 = vrot.slane %v141, 4
  %v510 = vrot.slane %v142, 4
  %v511 = vrot.slane %v143, 4
  %v512 = vrot.slane %v144, 4
  %v517 = vmul.f32 %v481, %v509
  %v518 = vmul.f32 %v482, %v510
  %v519 = vmul.f32 %v483, %v511
  %v520 = vmul.f32 %v484, %v512
  %v521 = vsub.f32 %v501, %v517
  %v522 = vsub.f32 %v502, %v518
  %v523 = vsub.f32 %v503, %v519
  %v524 = vsub.f32 %v504, %v520
  %v525 = vadd.f32 %v494, 1.0
  %v526 = vadd.f32 %v496, 1.0
  %v527 = vadd.f32 %v498, 1.0
  %v528 = vadd.f32 %v500, 1.0
  %v529 = vlog2.pop %v525
  %v530 = vmul.f32 %v529, 0.6931472
  %v531 = vlog2.pop %v526
  %v532 = vmul.f32 %v531, 0.6931472
  %v533 = vlog2.pop %v527
  %v534 = vmul.f32 %v533, 0.6931472
  %v535 = vlog2.pop %v528
  %v536 = vmul.f32 %v535, 0.6931472
  %v537 = vadd.f32 %v521, %v530
  %v538 = vadd.f32 %v522, %v532
  %v539 = vadd.f32 %v523, %v534
  %v540 = vadd.f32 %v524, %v536
  %v545 = vrot.slane %v537, 1
  %v546 = vrot.slane %v538, 1
  %v547 = vrot.slane %v539, 1
  %v548 = vrot.slane %v540, 1
  %v553 = vadd.f32 %v537, %v545
  %v554 = vadd.f32 %v538, %v546
  %v555 = vadd.f32 %v539, %v547
  %v556 = vadd.f32 %v540, %v548
  %v557 = vmul.f32 %v553, %v420
  %v558 = vmul.f32 %v554, %v424
  %v559 = vmul.f32 %v555, %v428
  %v560 = vmul.f32 %v556, %v432
  %v565 = vrot.slane %v145, 4
  %v566 = vrot.slane %v146, 4
  %v567 = vrot.slane %v147, 4
  %v568 = vrot.slane %v148, 4
  %v573 = vsub.f32 %v119, %v565
  %v574 = vsub.f32 %v120, %v566
  %v575 = vsub.f32 %v121, %v567
  %v576 = vsub.f32 %v122, %v568
  %v577 = vand.u32 2147483647, %v573
  %v578 = vand.u32 2147483647, %v574
  %v579 = vand.u32 2147483647, %v575
  %v580 = vand.u32 2147483647, %v576
  %vm581 = vcmp.lt.f32.partialorder %v577, 1.0
  %vm582 = vcmp.lt.f32.partialorder %v578, 1.0
  %vm583 = vcmp.lt.f32.partialorder %v579, 1.0
  %vm584 = vcmp.lt.f32.partialorder %v580, 1.0
  %v585 = vmul.f32 %v577, 0.5
  %v586 = vmul.f32 %v578, 0.5
  %v587 = vmul.f32 %v579, 0.5
  %v588 = vmul.f32 %v580, 0.5
  %v589 = vmul.f32 %v585, %v577
  %v590 = vmul.f32 %v586, %v578
  %v591 = vmul.f32 %v587, %v579
  %v592 = vmul.f32 %v588, %v580
  %v593 = vsub.f32 %v577, 0.5
  %v594 = vsub.f32 %v578, 0.5
  %v595 = vsub.f32 %v579, 0.5
  %v596 = vsub.f32 %v580, 0.5
  %v597 = vsel %vm581, %v589, %v593
  %v598 = vsel %vm582, %v590, %v594
  %v599 = vsel %vm583, %v591, %v595
  %v600 = vsel %vm584, %v592, %v596
  %v605 = vrot.slane %v597, 1
  %v606 = vrot.slane %v598, 1
  %v607 = vrot.slane %v599, 1
  %v608 = vrot.slane %v600, 1
  %v613 = vadd.f32 %v597, %v605
  %v614 = vadd.f32 %v598, %v606
  %v615 = vadd.f32 %v599, %v607
  %v616 = vadd.f32 %v600, %v608
  %v617 = vmul.f32 %v392, %v420
  %v618 = vmul.f32 %v393, %v424
  %v619 = vmul.f32 %v394, %v428
  %v620 = vmul.f32 %v395, %v432
  %v621 = vmul.f32 %v613, %v617
  %v622 = vmul.f32 %v614, %v618
  %v623 = vmul.f32 %v615, %v619
  %v624 = vmul.f32 %v616, %v620
  %v629 = vrot.slane %v149, 4
  %v630 = vrot.slane %v150, 4
  %v631 = vrot.slane %v151, 4
  %v632 = vrot.slane %v152, 4
  %v637 = vsub.f32 %v131, %v629
  %v638 = vsub.f32 %v132, %v630
  %v639 = vsub.f32 %v133, %v631
  %v640 = vsub.f32 %v134, %v632
  %v641 = vand.u32 2147483647, %v637
  %v642 = vand.u32 2147483647, %v638
  %v643 = vand.u32 2147483647, %v639
  %v644 = vand.u32 2147483647, %v640
  %vm645 = vcmp.lt.f32.partialorder %v641, 0.11111111
  %vm646 = vcmp.lt.f32.partialorder %v642, 0.11111111
  %vm647 = vcmp.lt.f32.partialorder %v643, 0.11111111
  %vm648 = vcmp.lt.f32.partialorder %v644, 0.11111111
  %v649 = vmul.f32 %v641, 4.5
  %v650 = vmul.f32 %v642, 4.5
  %v651 = vmul.f32 %v643, 4.5
  %v652 = vmul.f32 %v644, 4.5
  %v653 = vmul.f32 %v649, %v641
  %v654 = vmul.f32 %v650, %v642
  %v655 = vmul.f32 %v651, %v643
  %v656 = vmul.f32 %v652, %v644
  %v657 = vsub.f32 %v641, 0.055555556
  %v658 = vsub.f32 %v642, 0.055555556
  %v659 = vsub.f32 %v643, 0.055555556
  %v660 = vsub.f32 %v644, 0.055555556
  %v661 = vsel %vm645, %v653, %v657
  %v662 = vsel %vm646, %v654, %v658
  %v663 = vsel %vm647, %v655, %v659
  %v664 = vsel %vm648, %v656, %v660
  %v669 = vrot.slane %v661, 1
  %v670 = vrot.slane %v662, 1
  %v671 = vrot.slane %v663, 1
  %v672 = vrot.slane %v664, 1
  %v677 = vadd.f32 %v661, %v669
  %v678 = vadd.f32 %v662, %v670
  %v679 = vadd.f32 %v663, %v671
  %v680 = vadd.f32 %v664, %v672
  %v681 = vrot.slane %v661, 2
  %v682 = vrot.slane %v662, 2
  %v683 = vrot.slane %v663, 2
  %v684 = vrot.slane %v664, 2
  %v689 = vadd.f32 %v677, %v681
  %v690 = vadd.f32 %v678, %v682
  %v691 = vadd.f32 %v679, %v683
  %v692 = vadd.f32 %v680, %v684
  %v693 = vrot.slane %v661, 3
  %v694 = vrot.slane %v662, 3
  %v695 = vrot.slane %v663, 3
  %v696 = vrot.slane %v664, 3
  %v701 = vadd.f32 %v689, %v693
  %v702 = vadd.f32 %v690, %v694
  %v703 = vadd.f32 %v691, %v695
  %v704 = vadd.f32 %v692, %v696
  %v705 = vmul.f32 %v701, %v420
  %v706 = vmul.f32 %v702, %v424
  %v707 = vmul.f32 %v703, %v428
  %v708 = vmul.f32 %v704, %v432
  %v709 = vsub.f32 %v136, %v154
  %v710 = vand.u32 2147483647, %v709
  %vm711 = vcmp.lt.f32.partialorder %v710, 0.11111111
  %v712 = vmul.f32 %v710, 4.5
  %v713 = vmul.f32 %v712, %v710
  %v714 = vsub.f32 %v710, 0.055555556
  %v715 = vsel %vm711, %v713, %v714
  %v716 = vmul.f32 %v715, %v163
  %v717 = vand.u32 2147483647, %v123
  %v718 = vand.u32 2147483647, %v124
  %v719 = vand.u32 2147483647, %v125
  %v720 = vand.u32 2147483647, %v126
  %v721 = vsub.f32 0.0, %v717
  %v722 = vsub.f32 0.0, %v718
  %v723 = vsub.f32 0.0, %v719
  %v724 = vsub.f32 0.0, %v720
  %v725 = vmul.f32 %v721, 1.442695
  %v726 = vpow.pop %v725
  %v727 = vmul.f32 %v722, 1.442695
  %v728 = vpow.pop %v727
  %v729 = vmul.f32 %v723, 1.442695
  %v730 = vpow.pop %v729
  %v731 = vmul.f32 %v724, 1.442695
  %v732 = vpow.pop %v731
  %v733 = vadd.f32 %v726, 1.0
  %v734 = vadd.f32 %v728, 1.0
  %v735 = vadd.f32 %v730, 1.0
  %v736 = vadd.f32 %v732, 1.0
  %v737 = vlog2.pop %v733
  %v738 = vmul.f32 %v737, 0.6931472
  %v739 = vlog2.pop %v734
  %v740 = vmul.f32 %v739, 0.6931472
  %v741 = vlog2.pop %v735
  %v742 = vmul.f32 %v741, 0.6931472
  %v743 = vlog2.pop %v736
  %v744 = vmul.f32 %v743, 0.6931472
  %vm745 = vcmp.ge.f32.partialorder %v123, 0.0
  %vm746 = vcmp.ge.f32.partialorder %v124, 0.0
  %vm747 = vcmp.ge.f32.partialorder %v125, 0.0
  %vm748 = vcmp.ge.f32.partialorder %v126, 0.0
  %v749 = vsel %vm745, 1.0, %v726
  %v750 = vsel %vm746, 1.0, %v728
  %v751 = vsel %vm747, 1.0, %v730
  %v752 = vsel %vm748, 1.0, %v732
  %v753 = vrcp.pop %v733
  %v754 = vmul.f32 %v749, %v753
  %v755 = vrcp.pop %v734
  %v756 = vmul.f32 %v750, %v755
  %v757 = vrcp.pop %v735
  %v758 = vmul.f32 %v751, %v757
  %v759 = vrcp.pop %v736
  %v760 = vmul.f32 %v752, %v759
  %v761 = vmin.f32 %v123, 0.0
  %v762 = vmin.f32 %v124, 0.0
  %v763 = vmin.f32 %v125, 0.0
  %v764 = vmin.f32 %v126, 0.0
  %v765 = vsub.f32 %v761, %v738
  %v766 = vsub.f32 %v762, %v740
  %v767 = vsub.f32 %v763, %v742
  %v768 = vsub.f32 %v764, %v744
  %v769 = vmax.f32 %v123, 0.0
  %v770 = vmax.f32 %v124, 0.0
  %v771 = vmax.f32 %v125, 0.0
  %v772 = vmax.f32 %v126, 0.0
  %v773 = vsub.f32 0.0, %v769
  %v774 = vsub.f32 0.0, %v770
  %v775 = vsub.f32 0.0, %v771
  %v776 = vsub.f32 0.0, %v772
  %v777 = vsub.f32 %v773, %v738
  %v778 = vsub.f32 %v774, %v740
  %v779 = vsub.f32 %v775, %v742
  %v780 = vsub.f32 %v776, %v744
  %vm781 = vcmp.eq.f32.partialorder %v159, 1.0
  %vm782 = vcmp.eq.f32.partialorder %v160, 1.0
  %vm783 = vcmp.eq.f32.partialorder %v161, 1.0
  %vm784 = vcmp.eq.f32.partialorder %v162, 1.0
  %v785 = vsel %vm781, 1, 0
  %v786 = vsel %vm782, 1, 0
  %v787 = vsel %vm783, 1, 0
  %v788 = vsel %vm784, 1, 0
  %v789 = vcvt.s32.f32 %v785
  %v790 = vcvt.s32.f32 %v786
  %v791 = vcvt.s32.f32 %v787
  %v792 = vcvt.s32.f32 %v788
  %v793 = vmul.f32 %v159, 0.99
  %v794 = vmul.f32 %v160, 0.99
  %v795 = vmul.f32 %v161, 0.99
  %v796 = vmul.f32 %v162, 0.99
  %v797 = vadd.f32 %v793, 0.0025
  %v798 = vadd.f32 %v794, 0.0025
  %v799 = vadd.f32 %v795, 0.0025
  %v800 = vadd.f32 %v796, 0.0025
  %v801 = vsub.f32 1.0, %v754
  %v802 = vsub.f32 1.0, %v756
  %v803 = vsub.f32 1.0, %v758
  %v804 = vsub.f32 1.0, %v760
  %v805 = vsub.f32 1.0, %v797
  %v806 = vsub.f32 1.0, %v798
  %v807 = vsub.f32 1.0, %v799
  %v808 = vsub.f32 1.0, %v800
  %v809 = vmul.f32 %v805, %v805
  %v810 = vmul.f32 %v806, %v806
  %v811 = vmul.f32 %v807, %v807
  %v812 = vmul.f32 %v808, %v808
  %v813 = vsub.f32 0.0, %v789
  %v814 = vsub.f32 0.0, %v790
  %v815 = vsub.f32 0.0, %v791
  %v816 = vsub.f32 0.0, %v792
  %v817 = vmul.f32 %v813, %v797
  %v818 = vmul.f32 %v814, %v798
  %v819 = vmul.f32 %v815, %v799
  %v820 = vmul.f32 %v816, %v800
  %v821 = vmul.f32 %v801, %v801
  %v822 = vmul.f32 %v802, %v802
  %v823 = vmul.f32 %v803, %v803
  %v824 = vmul.f32 %v804, %v804
  %v829 = vrot.slane %v821, 1
  %v830 = vrot.slane %v822, 1
  %v831 = vrot.slane %v823, 1
  %v832 = vrot.slane %v824, 1
  %v837 = vmul.f32 %v817, %v829
  %v838 = vmul.f32 %v818, %v830
  %v839 = vmul.f32 %v819, %v831
  %v840 = vmul.f32 %v820, %v832
  %v845 = vrot.slane %v765, 1
  %v846 = vrot.slane %v766, 1
  %v847 = vrot.slane %v767, 1
  %v848 = vrot.slane %v768, 1
  %v853 = vmul.f32 %v837, %v845
  %v854 = vmul.f32 %v838, %v846
  %v855 = vmul.f32 %v839, %v847
  %v856 = vmul.f32 %v840, %v848
  %v857 = vmul.f32 %v853, 5.0
  %v858 = vmul.f32 %v854, 5.0
  %v859 = vmul.f32 %v855, 5.0
  %v860 = vmul.f32 %v856, 5.0
  %v861 = vsub.f32 1.0, %v789
  %v862 = vsub.f32 1.0, %v790
  %v863 = vsub.f32 1.0, %v791
  %v864 = vsub.f32 1.0, %v792
  %v865 = vmul.f32 %v809, %v809
  %v866 = vmul.f32 %v810, %v810
  %v867 = vmul.f32 %v811, %v811
  %v868 = vmul.f32 %v812, %v812
  %v869 = vmul.f32 %v861, %v865
  %v870 = vmul.f32 %v862, %v866
  %v871 = vmul.f32 %v863, %v867
  %v872 = vmul.f32 %v864, %v868
  %v873 = vmul.f32 %v754, %v754
  %v874 = vmul.f32 %v756, %v756
  %v875 = vmul.f32 %v758, %v758
  %v876 = vmul.f32 %v760, %v760
  %v881 = vrot.slane %v873, 1
  %v882 = vrot.slane %v874, 1
  %v883 = vrot.slane %v875, 1
  %v884 = vrot.slane %v876, 1
  %v889 = vmul.f32 %v869, %v881
  %v890 = vmul.f32 %v870, %v882
  %v891 = vmul.f32 %v871, %v883
  %v892 = vmul.f32 %v872, %v884
  %v897 = vrot.slane %v777, 1
  %v898 = vrot.slane %v778, 1
  %v899 = vrot.slane %v779, 1
  %v900 = vrot.slane %v780, 1
  %v905 = vmul.f32 %v889, %v897
  %v906 = vmul.f32 %v890, %v898
  %v907 = vmul.f32 %v891, %v899
  %v908 = vmul.f32 %v892, %v900
  %v909 = vsub.f32 %v857, %v905
  %v910 = vsub.f32 %v858, %v906
  %v911 = vsub.f32 %v859, %v907
  %v912 = vsub.f32 %v860, %v908
  %v917 = vrot.slane %v909, 1
  %v918 = vrot.slane %v910, 1
  %v919 = vrot.slane %v911, 1
  %v920 = vrot.slane %v912, 1
  %v925 = vadd.f32 %v909, %v917
  %v926 = vadd.f32 %v910, %v918
  %v927 = vadd.f32 %v911, %v919
  %v928 = vadd.f32 %v912, %v920
  %v929 = vrot.slane %v909, 2
  %v930 = vrot.slane %v910, 2
  %v931 = vrot.slane %v911, 2
  %v932 = vrot.slane %v912, 2
  %v937 = vadd.f32 %v925, %v929
  %v938 = vadd.f32 %v926, %v930
  %v939 = vadd.f32 %v927, %v931
  %v940 = vadd.f32 %v928, %v932
  %v941 = vrot.slane %v909, 3
  %v942 = vrot.slane %v910, 3
  %v943 = vrot.slane %v911, 3
  %v944 = vrot.slane %v912, 3
  %v949 = vadd.f32 %v937, %v941
  %v950 = vadd.f32 %v938, %v942
  %v951 = vadd.f32 %v939, %v943
  %v952 = vadd.f32 %v940, %v944
  %v953 = vadd.f32 %v437, %v438
  %v954 = vadd.f32 %v953, %v439
  %v955 = vadd.f32 %v954, %v440
  %v956 = vadd.f32 %v949, %v950
  %v957 = vadd.f32 %v956, %v951
  %v958 = vadd.f32 %v957, %v952
  %v959 = vadd.f32 %v705, %v706
  %v960 = vadd.f32 %v959, %v707
  %v961 = vadd.f32 %v960, %v708
  %v963 = vrot.slane %v716, 1
  %v965 = vadd.f32 %v716, %v963
  %v966 = vrot.slane %v716, 2
  %v968 = vadd.f32 %v965, %v966
  %v969 = vrot.slane %v716, 3
  %v971 = vadd.f32 %v968, %v969
  %v972 = vadd.f32 %v557, %v558
  %v973 = vadd.f32 %v972, %v559
  %v974 = vadd.f32 %v973, %v560
  %v975 = vadd.f32 %v621, %v622
  %v976 = vadd.f32 %v975, %v623
  %v977 = vadd.f32 %v976, %v624
  %v979 = vrot.slane %v955, 2
  %v982 = vrot.slane %v958, 7
  %v985 = vrot.slane %v961, 2
  %v988 = vlaneseq
  %v989 = vshrl.u32 %v988, 7
  %v990 = vsub.s32 0, %v989
  %v991 = vrot.slane %v971, %v990
  %v994 = vrot.slane %v974, 4
  %v997 = vrot.slane %v977, 5
  %vm999 = vcmask 1040384
  %v1000 = vsel %vm999, %v979, %v982
  %vm1001 = vcmask 1041408
  %v1002 = vsel %vm1001, %v1000, %v985
  %vm1003 = vcmask 1042432
  %v1004 = vsel %vm1003, %v1002, %v991
  %vm1005 = vcmask 1043456
  %v1006 = vsel %vm1005, %v1004, %v994
  %vm1007 = vcmask 1044480
  %v1008 = vsel %vm1007, %v1006, %v997
  %vm1009 = vcmask 1045504
  %v1010 = vsel %vm1009, %v1008, 0.0
  %v1011 = vld [vmem:[%s3] sm:$0xff]
  %v1012 = vadd.f32 %v1011, %v1010
  %1013 = vst [vmem:[%s3] sm:$0xff] %v1012
  // Predicated region
  $region18: #{gghl_centernet_loss.1} parent=0 // pred_check
    _
  $region19: #{gghl_centernet_loss.1} parent=0 // pred_check_branch
    %1015 = sbr.rel (0) target = $region21
  $region20: #{gghl_centernet_loss.1} parent=0 // pred_region
    _
  $region21: #{gghl_centernet_loss.1} parent=0 // pred_fallthru
    _
  // Predicated region
  $region22: #{gghl_centernet_loss.1} parent=0 // pred_check
    _
  $region23: #{gghl_centernet_loss.1} parent=0 // pred_check_branch
    %1017 = sbr.rel (0) target = $region25
  $region24: #{gghl_centernet_loss.1} parent=0 // pred_region
    _
  $region25: #{gghl_centernet_loss.1} parent=0 // pred_fallthru
    _

</llo_original>
